<compile_context>
chip_gen: v6e
topology: v6e:2x2x1
jax: 0.10.0
libtpu: 0.0.40
codegen_flags: <defaults>
</compile_context>

<pallas_src>
import functools

import jax
import jax.numpy as jnp
import numpy as np
from jax.experimental import pallas as pl
from jax.experimental.pallas import tpu as pltpu


def _sam_kernel(x_ref, ximg_ref, w12_ref, w3_ref, out1_ref, img_ref, *, c, oc):
    # x_ref:    (C,  TP)   channel-major pixel tile (pixels on lanes)
    # ximg_ref: (OC, TP)
    # w12_ref:  (C+OC, C)  [conv1.weight ; conv2.weight] in (out, in) form
    # w3_ref:   (C, OC)    conv3.weight in (out, in) form
    x = x_ref[...].astype(jnp.float32)                         # (C, TP)

    # Fused conv1 + conv2: one MXU pass, (C+OC, C) @ (C, TP) -> (C+OC, TP).
    y = jnp.dot(w12_ref[...], x, preferred_element_type=jnp.float32)
    x1 = y[:c, :]                                              # (C,  TP)
    img = y[c:, :] + ximg_ref[...].astype(jnp.float32)         # (OC, TP)

    # conv3 contracts over only OC (=3) channels: do it with VPU broadcast
    # multiply-adds (the VALU has slack; a K=3 MXU matmul would be ~3/256 eff).
    w3 = w3_ref[...].astype(jnp.float32)                       # (C, OC)
    acc = w3[:, 0:1] * img[0:1, :]                             # (C, TP)
    for k in range(1, oc):
        acc = acc + w3[:, k:k + 1] * img[k:k + 1, :]
    x2 = jax.nn.sigmoid(acc)

    # x1 = x1 * x2 + x   (residual)
    out1_ref[...] = (x1 * x2 + x).astype(out1_ref.dtype)
    img_ref[...] = img.astype(img_ref.dtype)


def _choose_tile_p(hw, n, *, max_tile=2048, min_steps=8):
    """Lane-dense pixel tile: multiple of 128, <=2048, keep >= ~min_steps grid steps."""
    if hw <= 128:
        return hw                      # full-extent block (allowed even if <128)
    tp = min(max_tile, ((hw + 127) // 128) * 128)
    while tp > 128 and n * ((hw + tp - 1) // tp) < min_steps:
        tp = max(128, ((tp // 2) // 128) * 128)
    return tp


@functools.partial(jax.jit, static_argnames=("tile_p",))
def supervised_attention(x, x_img, w1, w2, w3, *, tile_p=None):
    """Fused SAM forward (kernel_size=1).

    x:     (N, C, H, W)   float32 (NCHW, like PyTorch)
    x_img: (N, OC, H, W)  float32
    w1:    (C, C, 1, 1)   conv1.weight
    w2:    (OC, C, 1, 1)  conv2.weight
    w3:    (C, OC, 1, 1)  conv3.weight
    returns (x1, img) with shapes ((N, C, H, W), (N, OC, H, W)).
    """
    n, c, h, w = x.shape
    oc = w2.shape[0]
    hw = h * w
    if tile_p is None:
        tile_p = _choose_tile_p(hw, n)

    # Channel-major views: pure reshapes, no transposes / extra HBM passes.
    x3 = x.reshape(n, c, hw)
    ximg3 = x_img.reshape(n, oc, hw)

    # Pad pixels so the lane dim tiles evenly (no-op when hw % tile_p == 0).
    hwp = ((hw + tile_p - 1) // tile_p) * tile_p
    if hwp != hw:
        pad = hwp - hw
        x3 = jnp.pad(x3, ((0, 0), (0, 0), (0, pad)))
        ximg3 = jnp.pad(ximg3, ((0, 0), (0, 0), (0, pad)))

    # Conv weights (out, in, 1, 1) -> matmul form; fuse conv1/conv2 weights.
    w12 = jnp.concatenate([w1[:, :, 0, 0], w2[:, :, 0, 0]], axis=0)  # (C+OC, C)
    w3m = w3[:, :, 0, 0]                                             # (C, OC)

    grid = (n, hwp // tile_p)
    kernel = functools.partial(_sam_kernel, c=c, oc=oc)

    out1_3, img3 = pl.pallas_call(
        kernel,
        out_shape=(
            jax.ShapeDtypeStruct((n, c, hwp), x.dtype),
            jax.ShapeDtypeStruct((n, oc, hwp), x.dtype),
        ),
        grid_spec=pltpu.PrefetchScalarGridSpec(
            num_scalar_prefetch=0,
            grid=grid,
            in_specs=[
                pl.BlockSpec((None, c, tile_p), lambda b, p: (b, 0, p)),
                pl.BlockSpec((None, oc, tile_p), lambda b, p: (b, 0, p)),
                pl.BlockSpec((c + oc, c), lambda b, p: (0, 0)),
                pl.BlockSpec((c, oc), lambda b, p: (0, 0)),
            ],
            out_specs=[
                pl.BlockSpec((None, c, tile_p), lambda b, p: (b, 0, p)),
                pl.BlockSpec((None, oc, tile_p), lambda b, p: (b, 0, p)),
            ],
        ),
        compiler_params=pltpu.CompilerParams(
            dimension_semantics=("parallel", "parallel")),
    )(x3, ximg3, w12, w3m)

    out1 = out1_3[:, :, :hw].reshape(n, c, h, w)
    img = img3[:, :, :hw].reshape(n, oc, h, w)
    return out1, img


def _reference(x, x_img, w1, w2, w3):
    """Pure-JAX reference (1x1 convs as einsums), matches PyTorch forward."""
    w1m = w1[:, :, 0, 0]  # (C, C)   (out, in)
    w2m = w2[:, :, 0, 0]  # (OC, C)
    w3m = w3[:, :, 0, 0]  # (C, OC)
    x1 = jnp.einsum("oc,nchw->nohw", w1m, x)
    img = jnp.einsum("oc,nchw->nohw", w2m, x) + x_img
    x2 = jax.nn.sigmoid(jnp.einsum("oc,nchw->nohw", w3m, img))
    return x1 * x2 + x, img


if __name__ == "__main__":
    # Module config: channels=64, out_channels=3, kernel_size=1 (see NOTE above).
    channels, out_channels = 64, 3
    N, H, W = 2, 16, 16

    key = jax.random.PRNGKey(0)
    k_x, k_img, k1, k2, k3 = jax.random.split(key, 5)

    x = jax.random.normal(k_x, (N, channels, H, W), dtype=jnp.float32)
    x_img = jax.random.normal(k_img, (N, out_channels, H, W), dtype=jnp.float32)

    # Deterministic weight init (kaiming-ish scale); conv weights (out, in, kH, kW).
    w1 = jax.random.normal(k1, (channels, channels, 1, 1), jnp.float32) / np.sqrt(channels)
    w2 = jax.random.normal(k2, (out_channels, channels, 1, 1), jnp.float32) / np.sqrt(channels)
    w3 = jax.random.normal(k3, (channels, out_channels, 1, 1), jnp.float32) / np.sqrt(out_channels)

    out1, img = supervised_attention(x, x_img, w1, w2, w3)
    jax.block_until_ready((out1, img))

    ref1, ref_img = _reference(x, x_img, w1, w2, w3)
    np.testing.assert_allclose(np.asarray(out1), np.asarray(ref1), rtol=1e-5, atol=1e-5)
    np.testing.assert_allclose(np.asarray(img), np.asarray(ref_img), rtol=1e-5, atol=1e-5)

    print("KERNEL_OK")
</pallas_src>

<mosaic_0001>
module attributes {stable_mosaic.version = 11 : i64} {
  func.func @_sam_kernel(%arg0: i32, %arg1: i32, %arg2: memref<1x64x128xf32, #tpu.memory_space<vmem>>, %arg3: memref<1x3x128xf32, #tpu.memory_space<vmem>>, %arg4: memref<67x64xf32, #tpu.memory_space<vmem>>, %arg5: memref<64x3xf32, #tpu.memory_space<vmem>>, %arg6: memref<1x64x128xf32, #tpu.memory_space<vmem>>, %arg7: memref<1x3x128xf32, #tpu.memory_space<vmem>>) attributes {dimension_semantics = [#tpu.dimension_semantics<parallel>, #tpu.dimension_semantics<parallel>], iteration_bounds = array<i64: 2, 2>, scalar_prefetch = 0 : i64, scratch_operands = 0 : i64, tpu.core_type = #tpu.core_type<tc>, window_params = [{transform_indices = @transform_0, window_bounds = array<i64: 1, 64, 128>}, {transform_indices = @transform_1, window_bounds = array<i64: 1, 3, 128>}, {pipeline_mode = #tpu.pipeline_mode<synchronous>, transform_indices = @transform_2, window_bounds = array<i64: 67, 64>}, {pipeline_mode = #tpu.pipeline_mode<synchronous>, transform_indices = @transform_3, window_bounds = array<i64: 64, 3>}, {transform_indices = @transform_4, window_bounds = array<i64: 1, 64, 128>}, {transform_indices = @transform_5, window_bounds = array<i64: 1, 3, 128>}]} {
    %c0 = arith.constant 0 : index
    %c0_0 = arith.constant 0 : index
    %c0_1 = arith.constant 0 : index
    %0 = vector.load %arg2[%c0, %c0_0, %c0_1] : memref<1x64x128xf32, #tpu.memory_space<vmem>>, vector<1x64x128xf32>
    %1 = vector.shape_cast %0 : vector<1x64x128xf32> to vector<64x128xf32>
    %c0_2 = arith.constant 0 : index
    %c0_3 = arith.constant 0 : index
    %2 = vector.load %arg4[%c0_2, %c0_3] : memref<67x64xf32, #tpu.memory_space<vmem>>, vector<67x64xf32>
    %cst = arith.constant dense<0.000000e+00> : vector<67x128xf32>
    %3 = tpu.matmul %2, %1, %cst {dimension_numbers = #tpu.dot_dimension_numbers<[1], [0], [0], [1], [0, 0, 1, 1], [], []>} : vector<67x64xf32>, vector<64x128xf32>, vector<67x128xf32> -> vector<67x128xf32>
    %4 = vector.extract_strided_slice %3 {offsets = [0, 0], sizes = [64, 128], strides = [1, 1]} : vector<67x128xf32> to vector<64x128xf32>
    %5 = vector.extract_strided_slice %3 {offsets = [64, 0], sizes = [3, 128], strides = [1, 1]} : vector<67x128xf32> to vector<3x128xf32>
    %c0_4 = arith.constant 0 : index
    %c0_5 = arith.constant 0 : index
    %c0_6 = arith.constant 0 : index
    %6 = vector.load %arg3[%c0_4, %c0_5, %c0_6] : memref<1x3x128xf32, #tpu.memory_space<vmem>>, vector<1x3x128xf32>
    %7 = vector.shape_cast %6 : vector<1x3x128xf32> to vector<3x128xf32>
    %8 = arith.addf %5, %7 : vector<3x128xf32>
    %c0_7 = arith.constant 0 : index
    %c0_8 = arith.constant 0 : index
    %9 = vector.load %arg5[%c0_7, %c0_8] : memref<64x3xf32, #tpu.memory_space<vmem>>, vector<64x3xf32>
    %10 = vector.extract_strided_slice %9 {offsets = [0, 0], sizes = [64, 1], strides = [1, 1]} : vector<64x3xf32> to vector<64x1xf32>
    %11 = vector.extract_strided_slice %8 {offsets = [0, 0], sizes = [1, 128], strides = [1, 1]} : vector<3x128xf32> to vector<1x128xf32>
    %12 = vector.broadcast %10 : vector<64x1xf32> to vector<64x128xf32>
    %13 = vector.broadcast %11 : vector<1x128xf32> to vector<64x128xf32>
    %14 = arith.mulf %12, %13 : vector<64x128xf32>
    %15 = vector.extract_strided_slice %9 {offsets = [0, 1], sizes = [64, 1], strides = [1, 1]} : vector<64x3xf32> to vector<64x1xf32>
    %16 = vector.extract_strided_slice %8 {offsets = [1, 0], sizes = [1, 128], strides = [1, 1]} : vector<3x128xf32> to vector<1x128xf32>
    %17 = vector.broadcast %15 : vector<64x1xf32> to vector<64x128xf32>
    %18 = vector.broadcast %16 : vector<1x128xf32> to vector<64x128xf32>
    %19 = arith.mulf %17, %18 : vector<64x128xf32>
    %20 = arith.addf %14, %19 : vector<64x128xf32>
    %21 = vector.extract_strided_slice %9 {offsets = [0, 2], sizes = [64, 1], strides = [1, 1]} : vector<64x3xf32> to vector<64x1xf32>
    %22 = vector.extract_strided_slice %8 {offsets = [2, 0], sizes = [1, 128], strides = [1, 1]} : vector<3x128xf32> to vector<1x128xf32>
    %23 = vector.broadcast %21 : vector<64x1xf32> to vector<64x128xf32>
    %24 = vector.broadcast %22 : vector<1x128xf32> to vector<64x128xf32>
    %25 = arith.mulf %23, %24 : vector<64x128xf32>
    %26 = arith.addf %20, %25 : vector<64x128xf32>
    %27 = arith.negf %26 : vector<64x128xf32>
    %28 = math.exp %27 : vector<64x128xf32>
    %cst_9 = arith.constant 1.000000e+00 : f32
    %29 = vector.broadcast %cst_9 : f32 to vector<64x128xf32>
    %30 = arith.addf %29, %28 : vector<64x128xf32>
    %31 = arith.divf %29, %30 : vector<64x128xf32>
    %32 = arith.mulf %4, %31 : vector<64x128xf32>
    %33 = arith.addf %32, %1 : vector<64x128xf32>
    %c0_10 = arith.constant 0 : index
    %c0_11 = arith.constant 0 : index
    %c0_12 = arith.constant 0 : index
    %34 = vector.load %arg6[%c0_10, %c0_11, %c0_12] : memref<1x64x128xf32, #tpu.memory_space<vmem>>, vector<1x64x128xf32>
    %35 = vector.shape_cast %34 : vector<1x64x128xf32> to vector<64x128xf32>
    %36 = vector.shape_cast %33 : vector<64x128xf32> to vector<1x64x128xf32>
    tpu.vector_store %arg6[%c0_10, %c0_11, %c0_12], %36 {strides = array<i32>} : memref<1x64x128xf32, #tpu.memory_space<vmem>>, vector<1x64x128xf32>,
    %c0_13 = arith.constant 0 : index
    %c0_14 = arith.constant 0 : index
    %c0_15 = arith.constant 0 : index
    %37 = vector.load %arg7[%c0_13, %c0_14, %c0_15] : memref<1x3x128xf32, #tpu.memory_space<vmem>>, vector<1x3x128xf32>
    %38 = vector.shape_cast %37 : vector<1x3x128xf32> to vector<3x128xf32>
    %39 = vector.shape_cast %8 : vector<3x128xf32> to vector<1x3x128xf32>
    tpu.vector_store %arg7[%c0_13, %c0_14, %c0_15], %39 {strides = array<i32>} : memref<1x3x128xf32, #tpu.memory_space<vmem>>, vector<1x3x128xf32>,
    return
  }
  func.func @transform_0(%arg0: i32, %arg1: i32) -> (i32, i32, i32) {
    %c0_i32 = arith.constant 0 : i32
    %c0_i32_0 = arith.constant 0 : i32
    return %arg0, %c0_i32, %arg1 : i32, i32, i32
  }
  func.func @transform_1(%arg0: i32, %arg1: i32) -> (i32, i32, i32) {
    %c0_i32 = arith.constant 0 : i32
    %c0_i32_0 = arith.constant 0 : i32
    return %arg0, %c0_i32, %arg1 : i32, i32, i32
  }
  func.func @transform_2(%arg0: i32, %arg1: i32) -> (i32, i32) {
    %c0_i32 = arith.constant 0 : i32
    %c0_i32_0 = arith.constant 0 : i32
    %c0_i32_1 = arith.constant 0 : i32
    return %c0_i32, %c0_i32_0 : i32, i32
  }
  func.func @transform_3(%arg0: i32, %arg1: i32) -> (i32, i32) {
    %c0_i32 = arith.constant 0 : i32
    %c0_i32_0 = arith.constant 0 : i32
    %c0_i32_1 = arith.constant 0 : i32
    return %c0_i32, %c0_i32_0 : i32, i32
  }
  func.func @transform_4(%arg0: i32, %arg1: i32) -> (i32, i32, i32) {
    %c0_i32 = arith.constant 0 : i32
    %c0_i32_0 = arith.constant 0 : i32
    return %arg0, %c0_i32, %arg1 : i32, i32, i32
  }
  func.func @transform_5(%arg0: i32, %arg1: i32) -> (i32, i32, i32) {
    %c0_i32 = arith.constant 0 : i32
    %c0_i32_0 = arith.constant 0 : i32
    return %arg0, %c0_i32, %arg1 : i32, i32, i32
  }
}

</mosaic_0001>

<llo_original>
// kernel: supervised_attention.1
$region0: #{supervised_attention.1}
  #allocation0 [shape = 'u32[]', space=smem, size = 0x4, offset = 0x4, fixed_abs, tag = 'smem constant byte address 0x4 - core index']
  #allocation1 [shape = 'u32[144,128]{1,0:T(1,128)}', space=vmem, size = 0x12000, scoped, tag = 'internal scratch']
  %s0 = inlined_call_operand.vmem [shape: f32[2,64,256], index: 0, kind: input, shape index: {}]
  %s1 = inlined_call_operand.vmem [shape: f32[2,3,256], index: 1, kind: input, shape index: {}]
  %s2 = inlined_call_operand.vmem [shape: f32[67,64], index: 2, kind: input, shape index: {}]
  %s3 = inlined_call_operand.vmem [shape: f32[64,3], index: 3, kind: input, shape index: {}]
  %s4 = inlined_call_operand.vmem [shape: f32[2,64,256], index: 4, kind: output, shape index: {0}]
  %s5 = inlined_call_operand.vmem [shape: f32[2,3,256], index: 5, kind: output, shape index: {1}]
  %6 = xla_tuple %s4, %s5
  %s7 = sld [smem:[#allocation0]]
  $region129: #{supervised_attention.1} parent=0
    _
  %s9 = ssub.s32 1, %s7
  %s10 = scalar_select 0, %s9, %s7
  $region1: #{supervised_attention.1} parent=0
    #allocation2 [shape = 'u8[65536]{0}', space=vmem, size = 0x10000, scoped, tag = 'input window, operand 0']
    #allocation3 [shape = 'u8[65536]{0}', space=vmem, size = 0x10000, scoped, tag = 'output window, operand 0']
    loop: start=0, step=1, limit=6
    $region2: #{supervised_attention.1} parent=1 // loop_pre_header
      _
    $region3: #{supervised_attention.1} parent=1 // loop_header
      %s12 = sphi 0, %s16
      %p13 = scmp.ge.s32.totalorder %s12, 6
      %s19 = sphi 0, %s31
      %s20 = sphi 0, %s27
      %s21 = sphi 0, %s19
      %s22 = sphi 0, %s20
      %s23 = sphi 0, %s21
      %s24 = sphi 0, %s22
      %s36 = sphi 0, %s38
      %s39 = sphi 0, %s36
      %s40 = sphi 0, %s39
      %s56 = sphi 0, %s40
      %s64 = sphi 0, %s66
      %s67 = sphi 0, %s64
      %s68 = sphi 0, %s67
      %s84 = sphi 0, %s68
      %s88 = sphi 0, %s88
      %s90 = sphi 0, %s88
      %s91 = sphi 0, %s90
      %s105 = sphi 0, %s91
      %s109 = sphi 0, %s109
      %s111 = sphi 0, %s109
      %s112 = sphi 0, %s111
      %s126 = sphi 0, %s112
      %s134 = sphi 0, %s136
      %s137 = sphi 0, %s134
      %s138 = sphi 0, %s137
      %s154 = sphi 0, %s138
      %s162 = sphi 0, %s164
      %s165 = sphi 0, %s162
      %s166 = sphi 0, %s165
      %s182 = sphi 0, %s166
    $region4: #{supervised_attention.1} parent=1 // loop_header_branch
      %15 = sbr.rel (%p13) target = $region8
    $region5: #{supervised_attention.1} parent=1 // loop_body
      %s17 = ssub.s32 %s12, 1
      %s18 = ssub.s32 %s12, 2
      %s25 = sadd.s32 1, %s20
      %p26 = scmp.ge.s32.totalorder %s25, 2
      %s27 = scalar_select %p26, 0, %s25
      %s28 = sadd.s32 1, %s19
      %s29 = scalar_select %p26, %s28, %s19
      %p30 = scmp.ge.s32.totalorder %s29, 2
      %s31 = scalar_select %p30, 0, %s29
      %s32 = ssub.s32 %s19, %s31
      %s33 = ssub.s32 %s20, %s27
      %s34 = sor.u32 %s32, %s33
      %p35 = scmp.eq.s32.totalorder %s34, 0
      %s37 = sadd.s32 %s36, 1
      %s38 = scalar_select %p35, %s36, %s37
      %p41 = pneg %p35
      %p42 = scmp.eq.s32.totalorder %s12, 3
      %p43 = por %p41, %p42
      %p44 = scmp.ne.s32.totalorder %s36, %s39
      %p45 = scmp.eq.s32.totalorder %s12, 0
      %p46 = por %p44, %p45
      %p47 = scmp.ne.s32.totalorder %s36, %s39
      %p48 = scmp.eq.s32.totalorder %s17, 3
      %p49 = por %p47, %p48
      %p50 = scmp.ne.s32.totalorder %s39, %s40
      %p51 = scmp.eq.s32.totalorder %s17, 0
      %p52 = por %p50, %p51
      %p53 = scmp.ne.s32.totalorder %s39, %s40
      %p54 = scmp.eq.s32.totalorder %s18, 3
      %p55 = por %p53, %p54
      %p57 = scmp.ne.s32.totalorder %s40, %s56
      %p58 = scmp.eq.s32.totalorder %s18, 0
      %p59 = por %p57, %p58
      %s60 = ssub.s32 %s19, %s31
      %s61 = ssub.s32 %s20, %s27
      %s62 = sor.u32 %s60, %s61
      %p63 = scmp.eq.s32.totalorder %s62, 0
      %s65 = sadd.s32 %s64, 1
      %s66 = scalar_select %p63, %s64, %s65
      %p69 = pneg %p63
      %p70 = scmp.eq.s32.totalorder %s12, 3
      %p71 = por %p69, %p70
      %p72 = scmp.ne.s32.totalorder %s64, %s67
      %p73 = scmp.eq.s32.totalorder %s12, 0
      %p74 = por %p72, %p73
      %p75 = scmp.ne.s32.totalorder %s64, %s67
      %p76 = scmp.eq.s32.totalorder %s17, 3
      %p77 = por %p75, %p76
      %p78 = scmp.ne.s32.totalorder %s67, %s68
      %p79 = scmp.eq.s32.totalorder %s17, 0
      %p80 = por %p78, %p79
      %p81 = scmp.ne.s32.totalorder %s67, %s68
      %p82 = scmp.eq.s32.totalorder %s18, 3
      %p83 = por %p81, %p82
      %p85 = scmp.ne.s32.totalorder %s68, %s84
      %p86 = scmp.eq.s32.totalorder %s18, 0
      %p87 = por %p85, %p86
      %s89 = sadd.s32 %s88, 1
      %p92 = scmp.eq.s32.totalorder %s12, 3
      %p93 = scmp.ne.s32.totalorder %s88, %s90
      %p94 = scmp.eq.s32.totalorder %s12, 0
      %p95 = por %p93, %p94
      %p96 = scmp.ne.s32.totalorder %s88, %s90
      %p97 = scmp.eq.s32.totalorder %s17, 3
      %p98 = por %p96, %p97
      %p99 = scmp.ne.s32.totalorder %s90, %s91
      %p100 = scmp.eq.s32.totalorder %s17, 0
      %p101 = por %p99, %p100
      %p102 = scmp.ne.s32.totalorder %s90, %s91
      %p103 = scmp.eq.s32.totalorder %s18, 3
      %p104 = por %p102, %p103
      %p106 = scmp.ne.s32.totalorder %s91, %s105
      %p107 = scmp.eq.s32.totalorder %s18, 0
      %p108 = por %p106, %p107
      %s110 = sadd.s32 %s109, 1
      %p113 = scmp.eq.s32.totalorder %s12, 3
      %p114 = scmp.ne.s32.totalorder %s109, %s111
      %p115 = scmp.eq.s32.totalorder %s12, 0
      %p116 = por %p114, %p115
      %p117 = scmp.ne.s32.totalorder %s109, %s111
      %p118 = scmp.eq.s32.totalorder %s17, 3
      %p119 = por %p117, %p118
      %p120 = scmp.ne.s32.totalorder %s111, %s112
      %p121 = scmp.eq.s32.totalorder %s17, 0
      %p122 = por %p120, %p121
      %p123 = scmp.ne.s32.totalorder %s111, %s112
      %p124 = scmp.eq.s32.totalorder %s18, 3
      %p125 = por %p123, %p124
      %p127 = scmp.ne.s32.totalorder %s112, %s126
      %p128 = scmp.eq.s32.totalorder %s18, 0
      %p129 = por %p127, %p128
      %s130 = ssub.s32 %s19, %s31
      %s131 = ssub.s32 %s20, %s27
      %s132 = sor.u32 %s130, %s131
      %p133 = scmp.eq.s32.totalorder %s132, 0
      %s135 = sadd.s32 %s134, 1
      %s136 = scalar_select %p133, %s134, %s135
      %p139 = pneg %p133
      %p140 = scmp.eq.s32.totalorder %s12, 3
      %p141 = por %p139, %p140
      %p142 = scmp.ne.s32.totalorder %s134, %s137
      %p143 = scmp.eq.s32.totalorder %s12, 0
      %p144 = por %p142, %p143
      %p145 = scmp.ne.s32.totalorder %s134, %s137
      %p146 = scmp.eq.s32.totalorder %s17, 3
      %p147 = por %p145, %p146
      %p148 = scmp.ne.s32.totalorder %s137, %s138
      %p149 = scmp.eq.s32.totalorder %s17, 0
      %p150 = por %p148, %p149
      %p151 = scmp.ne.s32.totalorder %s137, %s138
      %p152 = scmp.eq.s32.totalorder %s18, 3
      %p153 = por %p151, %p152
      %p155 = scmp.ne.s32.totalorder %s138, %s154
      %p156 = scmp.eq.s32.totalorder %s18, 0
      %p157 = por %p155, %p156
      %s158 = ssub.s32 %s19, %s31
      %s159 = ssub.s32 %s20, %s27
      %s160 = sor.u32 %s158, %s159
      %p161 = scmp.eq.s32.totalorder %s160, 0
      %s163 = sadd.s32 %s162, 1
      %s164 = scalar_select %p161, %s162, %s163
      %p167 = pneg %p161
      %p168 = scmp.eq.s32.totalorder %s12, 3
      %p169 = por %p167, %p168
      %p170 = scmp.ne.s32.totalorder %s162, %s165
      %p171 = scmp.eq.s32.totalorder %s12, 0
      %p172 = por %p170, %p171
      %p173 = scmp.ne.s32.totalorder %s162, %s165
      %p174 = scmp.eq.s32.totalorder %s17, 3
      %p175 = por %p173, %p174
      %p176 = scmp.ne.s32.totalorder %s165, %s166
      %p177 = scmp.eq.s32.totalorder %s17, 0
      %p178 = por %p176, %p177
      %p179 = scmp.ne.s32.totalorder %s165, %s166
      %p180 = scmp.eq.s32.totalorder %s18, 3
      %p181 = por %p179, %p180
      %p183 = scmp.ne.s32.totalorder %s166, %s182
      %p184 = scmp.eq.s32.totalorder %s18, 0
      %p185 = por %p183, %p184
      %p186 = scmp.le.s32.totalorder 1, %s12
      %p187 = scmp.lt.s32.totalorder %s12, 5
      %p188 = pnand %p186, %p187
      %p189 = pneg %p188
      // Predicated region
      $region9: #{supervised_attention.1} parent=5 // pred_check
        _
      $region10: #{supervised_attention.1} parent=5 // pred_check_branch
        %191 = sbr.rel (%p188) target = $region12
      $region11: #{supervised_attention.1} parent=5 // pred_region
        %s192 = ssub.s32 %s12, 1
        // Predicated region
        $region13: #{supervised_attention.1} parent=11 // pred_check
          %p193 = pneg %p101
        $region14: #{supervised_attention.1} parent=11 // pred_check_branch
          %195 = sbr.rel (%p193) target = $region16
        $region15: #{supervised_attention.1} parent=11 // pred_region
          _
        $region16: #{supervised_attention.1} parent=11 // pred_fallthru
          _
        // Predicated region
        $region17: #{supervised_attention.1} parent=11 // pred_check
          %p196 = pneg %p122
        $region18: #{supervised_attention.1} parent=11 // pred_check_branch
          %198 = sbr.rel (%p196) target = $region20
        $region19: #{supervised_attention.1} parent=11 // pred_region
          _
        $region20: #{supervised_attention.1} parent=11 // pred_fallthru
          _
      $region12: #{supervised_attention.1} parent=5 // pred_fallthru
        _
      %p199 = scmp.lt.s32.totalorder %s12, 4
      // Predicated region
      $region21: #{supervised_attention.1} parent=5 // pred_check
        %p200 = pneg %p199
      $region22: #{supervised_attention.1} parent=5 // pred_check_branch
        %202 = sbr.rel (%p200) target = $region24
      $region23: #{supervised_attention.1} parent=5 // pred_region
        // Predicated region
        $region25: #{supervised_attention.1} parent=23 // pred_check
          %p203 = pneg %p46
        $region26: #{supervised_attention.1} parent=23 // pred_check_branch
          %205 = sbr.rel (%p203) target = $region28
        $region27: #{supervised_attention.1} parent=23 // pred_region
          %s206 = sand.u32 %s36, 1
          %s207 = sand.u32 %s36, 1
          %s208 = smul.addr %s207, 64
          %s209 = scalar_lea.vmem [#allocation2], %s208
          %s210 = smul.addr %s19, 16
          %s211 = sadd.s32 %s20, %s210
          %s212 = smul.addr %s211, 8
          %s213 = scalar_lea.vmem %s0, %s212
          // Predicated region
          $region29: #{supervised_attention.1} parent=27 // pred_check
            _
          $region30: #{supervised_attention.1} parent=27 // pred_check_branch
            %215 = sbr.rel (0) target = $region32
          $region31: #{supervised_attention.1} parent=27 // pred_region
            // Predicated region
            $region33: #{supervised_attention.1} parent=31 // pred_check
              _
            $region34: #{supervised_attention.1} parent=31 // pred_check_branch
              %217 = sbr.rel (0) target = $region36
            $region35: #{supervised_attention.1} parent=31 // pred_region
              // Predicated region
              $region48: #{supervised_attention.1} parent=35 // pred_check
                _
              $region49: #{supervised_attention.1} parent=35 // pred_check_branch
                %247 = sbr.rel (0) target = $region51
              $region50: #{supervised_attention.1} parent=35 // pred_region
                loop: start=0, step=1, limit=1
                $region52: #{supervised_attention.1} parent=50 // loop_pre_header
                  _
                $region53: #{supervised_attention.1} parent=50 // loop_header
                  %s249 = sphi 0, %s253
                  %p250 = scmp.ge.s32.totalorder %s249, 1
                  %s254 = sphi %s213, %s213
                  %s255 = sphi %s209, %s209
                $region54: #{supervised_attention.1} parent=50 // loop_header_branch
                  %252 = sbr.rel (%p250) target = $region58
                $region55: #{supervised_attention.1} parent=50 // loop_body
                  %v256 = vld [vmem:[%s254] sm:$0xff]
                  %257 = vst [vmem:[%s255] sm:$0xff] %v256
                  %v258 = vld [vmem:[%s254 + $0x10] sm:$0xff]
                  %259 = vst [vmem:[%s255 + $0x8] sm:$0xff] %v258
                  %v260 = vld [vmem:[%s254 + $0x20] sm:$0xff]
                  %261 = vst [vmem:[%s255 + $0x10] sm:$0xff] %v260
                  %v262 = vld [vmem:[%s254 + $0x30] sm:$0xff]
                  %263 = vst [vmem:[%s255 + $0x18] sm:$0xff] %v262
                  %v264 = vld [vmem:[%s254 + $0x40] sm:$0xff]
                  %265 = vst [vmem:[%s255 + $0x20] sm:$0xff] %v264
                  %v266 = vld [vmem:[%s254 + $0x50] sm:$0xff]
                  %267 = vst [vmem:[%s255 + $0x28] sm:$0xff] %v266
                  %v268 = vld [vmem:[%s254 + $0x60] sm:$0xff]
                  %269 = vst [vmem:[%s255 + $0x30] sm:$0xff] %v268
                  %v270 = vld [vmem:[%s254 + $0x70] sm:$0xff]
                  %271 = vst [vmem:[%s255 + $0x38] sm:$0xff] %v270
                $region56: #{supervised_attention.1} parent=50 // loop_footer
                  %s253 = sadd.s32 1, %s249
                $region57: #{supervised_attention.1} parent=50 // loop_footer_branch
                  %248 = sbr.rel target = $region53
                $region58: #{supervised_attention.1} parent=50 // loop_exit
                  _
              $region51: #{supervised_attention.1} parent=35 // pred_fallthru
                _
              // Predicated region
              $region59: #{supervised_attention.1} parent=35 // pred_check
                _
              $region60: #{supervised_attention.1} parent=35 // pred_check_branch
                %273 = sbr.rel target = $region62
              $region61: #{supervised_attention.1} parent=35 // pred_region
                _
              $region62: #{supervised_attention.1} parent=35 // pred_fallthru
                _
            $region36: #{supervised_attention.1} parent=31 // pred_fallthru
              _
            // Predicated region
            $region37: #{supervised_attention.1} parent=31 // pred_check
              _
            $region38: #{supervised_attention.1} parent=31 // pred_check_branch
              %219 = sbr.rel target = $region40
            $region39: #{supervised_attention.1} parent=31 // pred_region
              %s221 = ssub.s32 256, 1
              loop: start=0, step=1, limit=1
              $region41: #{supervised_attention.1} parent=39 // loop_pre_header
                _
              $region42: #{supervised_attention.1} parent=39 // loop_header
                %s223 = sphi 0, %s227
                %p224 = scmp.ge.s32.totalorder %s223, 1
                %s228 = sphi %s213, %s213
                %s229 = sphi %s209, %s209
              $region43: #{supervised_attention.1} parent=39 // loop_header_branch
                %226 = sbr.rel (%p224) target = $region47
              $region44: #{supervised_attention.1} parent=39 // loop_body
                %v230 = vld [vmem:[%s228] sm:%s221]
                %231 = vst [vmem:[%s229] sm:%s221] %v230
                %v232 = vld [vmem:[%s228 + $0x10] sm:%s221]
                %233 = vst [vmem:[%s229 + $0x8] sm:%s221] %v232
                %v234 = vld [vmem:[%s228 + $0x20] sm:%s221]
                %235 = vst [vmem:[%s229 + $0x10] sm:%s221] %v234
                %v236 = vld [vmem:[%s228 + $0x30] sm:%s221]
                %237 = vst [vmem:[%s229 + $0x18] sm:%s221] %v236
                %v238 = vld [vmem:[%s228 + $0x40] sm:%s221]
                %239 = vst [vmem:[%s229 + $0x20] sm:%s221] %v238
                %v240 = vld [vmem:[%s228 + $0x50] sm:%s221]
                %241 = vst [vmem:[%s229 + $0x28] sm:%s221] %v240
                %v242 = vld [vmem:[%s228 + $0x60] sm:%s221]
                %243 = vst [vmem:[%s229 + $0x30] sm:%s221] %v242
                %v244 = vld [vmem:[%s228 + $0x70] sm:%s221]
                %245 = vst [vmem:[%s229 + $0x38] sm:%s221] %v244
              $region45: #{supervised_attention.1} parent=39 // loop_footer
                %s227 = sadd.s32 1, %s223
              $region46: #{supervised_attention.1} parent=39 // loop_footer_branch
                %222 = sbr.rel target = $region42
              $region47: #{supervised_attention.1} parent=39 // loop_exit
                _
            $region40: #{supervised_attention.1} parent=31 // pred_fallthru
              _
          $region32: #{supervised_attention.1} parent=27 // pred_fallthru
            _
          %274 = vnop
        $region28: #{supervised_attention.1} parent=23 // pred_fallthru
          _
        // Predicated region
        $region63: #{supervised_attention.1} parent=23 // pred_check
          %p275 = pneg %p74
        $region64: #{supervised_attention.1} parent=23 // pred_check_branch
          %277 = sbr.rel (%p275) target = $region66
        $region65: #{supervised_attention.1} parent=23 // pred_region
          %p278 = scmp.lt.s32.totalorder %s19, 1
          %s279 = scalar_select %p278, %s19, 1
          %p280 = scmp.lt.s32.totalorder %s20, 1
          %s281 = scalar_select %p280, %s20, 1
          %s282 = smul.addr %s279, 2
          %s283 = sadd.s32 %s281, %s282
          %s284 = smul.addr %s283, 4
          %s285 = scalar_lea.vmem %s1, %s284
        $region66: #{supervised_attention.1} parent=23 // pred_fallthru
          _
      $region24: #{supervised_attention.1} parent=5 // pred_fallthru
        _
      %p286 = scmp.le.s32.totalorder 1, %s12
      %p287 = scmp.lt.s32.totalorder %s12, 5
      %p288 = pnand %p286, %p287
      %p289 = pneg %p288
      // Predicated region
      $region67: #{supervised_attention.1} parent=5 // pred_check
        _
      $region68: #{supervised_attention.1} parent=5 // pred_check_branch
        %291 = sbr.rel (%p288) target = $region70
      $region69: #{supervised_attention.1} parent=5 // pred_region
        %s292 = ssub.s32 %s12, 1
        %s293 = sand.u32 %s39, 1
        %s294 = sand.u32 %s39, 1
        %s295 = smul.addr %s294, 64
        %s296 = scalar_lea.vmem [#allocation2], %s295
        // Predicated region
        $region71: #{supervised_attention.1} parent=69 // pred_check
          %p297 = pneg %p52
        $region72: #{supervised_attention.1} parent=69 // pred_check_branch
          %299 = sbr.rel (%p297) target = $region74
        $region73: #{supervised_attention.1} parent=69 // pred_region
          _
        $region74: #{supervised_attention.1} parent=69 // pred_fallthru
          _
        %s300 = sand.u32 %s39, 1
        %s301 = sand.u32 %s39, 1
        %s302 = smul.addr %s301, 64
        %s303 = scalar_lea.vmem [#allocation2], %s302
        %p304 = pneg %p52
        %p305 = pneg %p49
        %p306 = scmp.lt.s32.totalorder %s21, 1
        %s307 = scalar_select %p306, %s21, 1
        %p308 = scmp.lt.s32.totalorder %s22, 1
        %s309 = scalar_select %p308, %s22, 1
        %s310 = smul.addr %s307, 2
        %s311 = sadd.s32 %s309, %s310
        %s312 = smul.addr %s311, 4
        %s313 = scalar_lea.vmem %s1, %s312
        %p314 = pneg %p80
        %p315 = pneg %p77
        %p316 = pneg %p101
        %p317 = pneg %p98
        %p318 = pneg %p122
        %p319 = pneg %p119
        %p320 = pneg %p150
        %p321 = pneg %p147
        %s322 = sand.u32 %s137, 1
        %s323 = sand.u32 %s137, 1
        %s324 = smul.addr %s323, 64
        %s325 = scalar_lea.vmem [#allocation3], %s324
        %p326 = pneg %p178
        %p327 = pneg %p175
        %p328 = scmp.lt.s32.totalorder %s21, 1
        %s329 = scalar_select %p328, %s21, 1
        %p330 = scmp.lt.s32.totalorder %s22, 1
        %s331 = scalar_select %p330, %s22, 1
        %s332 = smul.addr %s329, 2
        %s333 = sadd.s32 %s331, %s332
        %s334 = smul.addr %s333, 4
        %s335 = scalar_lea.vmem %s5, %s334
        %p336 = scmp.lt.s32.totalorder %s21, 1
        %s337 = scalar_select %p336, %s21, 1
        %p338 = scmp.lt.s32.totalorder %s22, 1
        %s339 = scalar_select %p338, %s22, 1
        %s340 = smul.addr %s337, 2
        %s341 = sadd.s32 %s339, %s340
        %s342 = smul.addr %s341, 4
        %s343 = scalar_lea.vmem %s1, %s342
        %p344 = scmp.lt.s32.totalorder %s21, 1
        %s345 = scalar_select %p344, %s21, 1
        %p346 = scmp.lt.s32.totalorder %s22, 1
        %s347 = scalar_select %p346, %s22, 1
        %s348 = smul.addr %s345, 2
        %s349 = sadd.s32 %s347, %s348
        %s350 = smul.addr %s349, 4
        %s351 = scalar_lea.vmem %s5, %s350
        %v352 = vld [vmem:[%s296] sm:$0xff]
        %v353 = vld [vmem:[%s296 + $0x8] sm:$0xff]
        %v354 = vld [vmem:[%s296 + $0x10] sm:$0xff]
        %v355 = vld [vmem:[%s296 + $0x18] sm:$0xff]
        %v356 = vld [vmem:[%s296 + $0x20] sm:$0xff]
        %v357 = vld [vmem:[%s296 + $0x28] sm:$0xff]
        %v358 = vld [vmem:[%s296 + $0x30] sm:$0xff]
        %v359 = vld [vmem:[%s296 + $0x38] sm:$0xff]
        %v360 = vld [vmem:[%s2] sm:$0xff]
        %v361 = vld [vmem:[%s2 + $0x8] sm:$0xff]
        %v362 = vld [vmem:[%s2 + $0x10] sm:$0xff]
        %v363 = vld [vmem:[%s2 + $0x18] sm:$0xff]
        %v364 = vld [vmem:[%s2 + $0x20] sm:$0xff]
        %v365 = vld [vmem:[%s2 + $0x28] sm:$0xff]
        %v366 = vld [vmem:[%s2 + $0x30] sm:$0xff]
        %v367 = vld [vmem:[%s2 + $0x38] sm:$0xff]
        %v368 = vld [vmem:[%s2 + $0x40] sm:$0x7]
        %vm369 = vcmask 523264
        %v371 = vsel %vm369, %v360, 0
        %v374 = vsel %vm369, %v361, 0
        %v377 = vsel %vm369, %v362, 0
        %v380 = vsel %vm369, %v363, 0
        %v383 = vsel %vm369, %v364, 0
        %v386 = vsel %vm369, %v365, 0
        %v389 = vsel %vm369, %v366, 0
        %v392 = vsel %vm369, %v367, 0
        %v395 = vsel %vm369, %v368, 0
        %397 = vmatprep.subr.mxu0 0.0
        %398 = vmatpush1.msra.mxu0 0.0
        %399 = vmatprep.subr.mxu0 0.0
        %400 = vmatpush1.msra.mxu0 0.0
        %401 = vmatprep.subr.mxu0 0.0
        %402 = vmatpush1.msra.mxu0 0.0
        %403 = vmatprep.subr.mxu0 0.0
        %404 = vmatpush1.msra.mxu0 0.0
        %405 = vmatprep.subr.mxu0 0.0
        %406 = vmatpush1.msra.mxu0 0.0
        %407 = vmatprep.subr.mxu0 0.0
        %408 = vmatpush1.msra.mxu0 0.0
        %409 = vmatprep.subr.mxu0 0.0
        %410 = vmatpush1.msra.mxu0 0.0
        %411 = vmatprep.subr.mxu0 0.0
        %412 = vmatpush1.msra.mxu0 0.0
        %413 = vmatprep.subr.mxu0 0.0
        %414 = vmatpush1.msra.mxu0 %v359
        %415 = vmatprep.subr.mxu0 0.0
        %416 = vmatpush1.msra.mxu0 %v358
        %417 = vmatprep.subr.mxu0 0.0
        %418 = vmatpush1.msra.mxu0 %v357
        %419 = vmatprep.subr.mxu0 0.0
        %420 = vmatpush1.msra.mxu0 %v356
        %421 = vmatprep.subr.mxu0 0.0
        %422 = vmatpush1.msra.mxu0 %v355
        %423 = vmatprep.subr.mxu0 0.0
        %424 = vmatpush1.msra.mxu0 %v354
        %425 = vmatprep.subr.mxu0 0.0
        %426 = vmatpush1.msra.mxu0 %v353
        %427 = vmatprep.subr.mxu0 0.0
        %428 = vmatpush1.msra.mxu0 %v352
        %429 = vmatprep.subr.mxu0 0.0
        %430 = vmatpush2.msra.mxu0 0.0
        %431 = vmatprep.subr.mxu0 0.0
        %432 = vmatpush2.msra.mxu0 0.0
        %433 = vmatprep.subr.mxu0 0.0
        %434 = vmatpush2.msra.mxu0 0.0
        %435 = vmatprep.subr.mxu0 0.0
        %436 = vmatpush2.msra.mxu0 0.0
        %437 = vmatprep.subr.mxu0 0.0
        %438 = vmatpush2.msra.mxu0 0.0
        %439 = vmatprep.subr.mxu0 0.0
        %440 = vmatpush2.msra.mxu0 0.0
        %441 = vmatprep.subr.mxu0 0.0
        %442 = vmatpush2.msra.mxu0 0.0
        %443 = vmatprep.subr.mxu0 0.0
        %444 = vmatpush2.msra.mxu0 0.0
        %445 = vmatprep.subr.mxu0 0.0
        %446 = vmatpush2.msra.mxu0 0.0
        %447 = vmatprep.subr.mxu0 0.0
        %448 = vmatpush2.msra.mxu0 0.0
        %449 = vmatprep.subr.mxu0 0.0
        %450 = vmatpush2.msra.mxu0 0.0
        %451 = vmatprep.subr.mxu0 0.0
        %452 = vmatpush2.msra.mxu0 0.0
        %453 = vmatprep.subr.mxu0 0.0
        %454 = vmatpush2.msra.mxu0 0.0
        %455 = vmatprep.subr.mxu0 0.0
        %456 = vmatpush2.msra.mxu0 0.0
        %457 = vmatprep.subr.mxu0 0.0
        %458 = vmatpush2.msra.mxu0 0.0
        %459 = vmatprep.subr.mxu0 0.0
        %460 = vmatpush2.msra.mxu0 0.0
        %461 = vmatprep.mubr.f32.mxu0 0.0
        %462 = vmatmul.mubr.f32.gmra.mxu0 %v371
        %v463 = vpop.f32.mrf.mxu0
        %v464 = vadd.f32 0.0, %v463
        %v465 = vpop.f32.mrf.mxu0
        %466 = vmatprep.mubr.f32.mxu0 0.0
        %467 = vmatmul.mubr.f32.gmra.mxu0 %v374
        %v468 = vpop.f32.mrf.mxu0
        %v469 = vadd.f32 0.0, %v468
        %v470 = vpop.f32.mrf.mxu0
        %471 = vmatprep.mubr.f32.mxu0 0.0
        %472 = vmatmul.mubr.f32.gmra.mxu0 %v377
        %v473 = vpop.f32.mrf.mxu0
        %v474 = vadd.f32 0.0, %v473
        %v475 = vpop.f32.mrf.mxu0
        %476 = vmatprep.mubr.f32.mxu0 0.0
        %477 = vmatmul.mubr.f32.gmra.mxu0 %v380
        %v478 = vpop.f32.mrf.mxu0
        %v479 = vadd.f32 0.0, %v478
        %v480 = vpop.f32.mrf.mxu0
        %481 = vmatprep.mubr.f32.mxu0 0.0
        %482 = vmatmul.mubr.f32.gmra.mxu0 %v383
        %v483 = vpop.f32.mrf.mxu0
        %v484 = vadd.f32 0.0, %v483
        %v485 = vpop.f32.mrf.mxu0
        %486 = vmatprep.mubr.f32.mxu0 0.0
        %487 = vmatmul.mubr.f32.gmra.mxu0 %v386
        %v488 = vpop.f32.mrf.mxu0
        %v489 = vadd.f32 0.0, %v488
        %v490 = vpop.f32.mrf.mxu0
        %491 = vmatprep.mubr.f32.mxu0 0.0
        %492 = vmatmul.mubr.f32.gmra.mxu0 %v389
        %v493 = vpop.f32.mrf.mxu0
        %v494 = vadd.f32 0.0, %v493
        %v495 = vpop.f32.mrf.mxu0
        %496 = vmatprep.mubr.f32.mxu0 0.0
        %497 = vmatmul.mubr.f32.gmra.mxu0 %v392
        %v498 = vpop.f32.mrf.mxu0
        %v499 = vadd.f32 0.0, %v498
        %v500 = vpop.f32.mrf.mxu0
        %501 = vmatprep.mubr.f32.mxu0 0.0
        %502 = vmatmul.mubr.f32.gmra.mxu0 %v395
        %v503 = vpop.f32.mrf.mxu0
        %v504 = vadd.f32 0.0, %v503
        %v505 = vpop.f32.mrf.mxu0
        %506 = vdwg.mxu0
        %v507 = vld [vmem:[%s343] sm:$0x7]
        %v508 = vadd.f32 %v504, %v507
        %v509 = vld [vmem:[%s3] sm:$0xff]
        %v510 = vld [vmem:[%s3 + $0x8] sm:$0xff]
        %v511 = vld [vmem:[%s3 + $0x10] sm:$0xff]
        %v512 = vld [vmem:[%s3 + $0x18] sm:$0xff]
        %v513 = vld [vmem:[%s3 + $0x20] sm:$0xff]
        %v514 = vld [vmem:[%s3 + $0x28] sm:$0xff]
        %v515 = vld [vmem:[%s3 + $0x30] sm:$0xff]
        %v516 = vld [vmem:[%s3 + $0x38] sm:$0xff]
        %518 = vset.pattern.permute.xlu0 0
        %519 = vperm.xlu0 %518, %v509
        %v520 = vpop.permute.xlu0 %519
        %523 = vset.pattern.permute.xlu0 0
        %524 = vperm.xlu0 %523, %v510
        %v525 = vpop.permute.xlu0 %524
        %528 = vset.pattern.permute.xlu0 0
        %529 = vperm.xlu0 %528, %v511
        %v530 = vpop.permute.xlu0 %529
        %533 = vset.pattern.permute.xlu0 0
        %534 = vperm.xlu0 %533, %v512
        %v535 = vpop.permute.xlu0 %534
        %538 = vset.pattern.permute.xlu0 0
        %539 = vperm.xlu0 %538, %v513
        %v540 = vpop.permute.xlu0 %539
        %543 = vset.pattern.permute.xlu0 0
        %544 = vperm.xlu0 %543, %v514
        %v545 = vpop.permute.xlu0 %544
        %548 = vset.pattern.permute.xlu0 0
        %549 = vperm.xlu0 %548, %v515
        %v550 = vpop.permute.xlu0 %549
        %553 = vset.pattern.permute.xlu0 0
        %554 = vperm.xlu0 %553, %v516
        %v555 = vpop.permute.xlu0 %554
        %v557 = vlaneseq
        %v558 = vshrl.u32 %v557, 7
        %v559 = vsub.s32 0, %v558
        %v560 = vrot.slane %v508, %v559
        %v561 = vmul.f32 %v520, %v560
        %v562 = vmul.f32 %v525, %v560
        %v563 = vmul.f32 %v530, %v560
        %v564 = vmul.f32 %v535, %v560
        %v565 = vmul.f32 %v540, %v560
        %v566 = vmul.f32 %v545, %v560
        %v567 = vmul.f32 %v550, %v560
        %v568 = vmul.f32 %v555, %v560
        %569 = vset.pattern.permute.xlu0 1
        %570 = vperm.xlu0 %569, %v509
        %v571 = vpop.permute.xlu0 %570
        %573 = vset.pattern.permute.xlu0 1
        %574 = vperm.xlu0 %573, %v510
        %v575 = vpop.permute.xlu0 %574
        %577 = vset.pattern.permute.xlu0 1
        %578 = vperm.xlu0 %577, %v511
        %v579 = vpop.permute.xlu0 %578
        %581 = vset.pattern.permute.xlu0 1
        %582 = vperm.xlu0 %581, %v512
        %v583 = vpop.permute.xlu0 %582
        %585 = vset.pattern.permute.xlu0 1
        %586 = vperm.xlu0 %585, %v513
        %v587 = vpop.permute.xlu0 %586
        %589 = vset.pattern.permute.xlu0 1
        %590 = vperm.xlu0 %589, %v514
        %v591 = vpop.permute.xlu0 %590
        %593 = vset.pattern.permute.xlu0 1
        %594 = vperm.xlu0 %593, %v515
        %v595 = vpop.permute.xlu0 %594
        %597 = vset.pattern.permute.xlu0 1
        %598 = vperm.xlu0 %597, %v516
        %v599 = vpop.permute.xlu0 %598
        %v601 = vlaneseq
        %v602 = vshrl.u32 %v601, 7
        %v603 = vsub.s32 1, %v602
        %v604 = vrot.slane %v508, %v603
        %v605 = vmul.f32 %v571, %v604
        %v606 = vmul.f32 %v575, %v604
        %v607 = vmul.f32 %v579, %v604
        %v608 = vmul.f32 %v583, %v604
        %v609 = vmul.f32 %v587, %v604
        %v610 = vmul.f32 %v591, %v604
        %v611 = vmul.f32 %v595, %v604
        %v612 = vmul.f32 %v599, %v604
        %v613 = vadd.f32 %v561, %v605
        %v614 = vadd.f32 %v562, %v606
        %v615 = vadd.f32 %v563, %v607
        %v616 = vadd.f32 %v564, %v608
        %v617 = vadd.f32 %v565, %v609
        %v618 = vadd.f32 %v566, %v610
        %v619 = vadd.f32 %v567, %v611
        %v620 = vadd.f32 %v568, %v612
        %621 = vset.pattern.permute.xlu0 2
        %622 = vperm.xlu0 %621, %v509
        %v623 = vpop.permute.xlu0 %622
        %625 = vset.pattern.permute.xlu0 2
        %626 = vperm.xlu0 %625, %v510
        %v627 = vpop.permute.xlu0 %626
        %629 = vset.pattern.permute.xlu0 2
        %630 = vperm.xlu0 %629, %v511
        %v631 = vpop.permute.xlu0 %630
        %633 = vset.pattern.permute.xlu0 2
        %634 = vperm.xlu0 %633, %v512
        %v635 = vpop.permute.xlu0 %634
        %637 = vset.pattern.permute.xlu0 2
        %638 = vperm.xlu0 %637, %v513
        %v639 = vpop.permute.xlu0 %638
        %641 = vset.pattern.permute.xlu0 2
        %642 = vperm.xlu0 %641, %v514
        %v643 = vpop.permute.xlu0 %642
        %645 = vset.pattern.permute.xlu0 2
        %646 = vperm.xlu0 %645, %v515
        %v647 = vpop.permute.xlu0 %646
        %649 = vset.pattern.permute.xlu0 2
        %650 = vperm.xlu0 %649, %v516
        %v651 = vpop.permute.xlu0 %650
        %v653 = vlaneseq
        %v654 = vshrl.u32 %v653, 7
        %v655 = vsub.s32 2, %v654
        %v656 = vrot.slane %v508, %v655
        %v657 = vmul.f32 %v623, %v656
        %v658 = vmul.f32 %v627, %v656
        %v659 = vmul.f32 %v631, %v656
        %v660 = vmul.f32 %v635, %v656
        %v661 = vmul.f32 %v639, %v656
        %v662 = vmul.f32 %v643, %v656
        %v663 = vmul.f32 %v647, %v656
        %v664 = vmul.f32 %v651, %v656
        %v665 = vadd.f32 %v613, %v657
        %v666 = vadd.f32 %v614, %v658
        %v667 = vadd.f32 %v615, %v659
        %v668 = vadd.f32 %v616, %v660
        %v669 = vadd.f32 %v617, %v661
        %v670 = vadd.f32 %v618, %v662
        %v671 = vadd.f32 %v619, %v663
        %v672 = vadd.f32 %v620, %v664
        %v673 = vxor.u32 %v665, 2147483648
        %v674 = vxor.u32 %v666, 2147483648
        %v675 = vxor.u32 %v667, 2147483648
        %v676 = vxor.u32 %v668, 2147483648
        %v677 = vxor.u32 %v669, 2147483648
        %v678 = vxor.u32 %v670, 2147483648
        %v679 = vxor.u32 %v671, 2147483648
        %v680 = vxor.u32 %v672, 2147483648
        %v681 = vmul.f32 %v673, 1.442695
        %v682 = vpow.pop %v681
        %v683 = vmul.f32 %v674, 1.442695
        %v684 = vpow.pop %v683
        %v685 = vmul.f32 %v675, 1.442695
        %v686 = vpow.pop %v685
        %v687 = vmul.f32 %v676, 1.442695
        %v688 = vpow.pop %v687
        %v689 = vmul.f32 %v677, 1.442695
        %v690 = vpow.pop %v689
        %v691 = vmul.f32 %v678, 1.442695
        %v692 = vpow.pop %v691
        %v693 = vmul.f32 %v679, 1.442695
        %v694 = vpow.pop %v693
        %v695 = vmul.f32 %v680, 1.442695
        %v696 = vpow.pop %v695
        %v697 = vadd.f32 %v682, 1.0
        %v698 = vadd.f32 %v684, 1.0
        %v699 = vadd.f32 %v686, 1.0
        %v700 = vadd.f32 %v688, 1.0
        %v701 = vadd.f32 %v690, 1.0
        %v702 = vadd.f32 %v692, 1.0
        %v703 = vadd.f32 %v694, 1.0
        %v704 = vadd.f32 %v696, 1.0
        %v705 = vrcp.pop %v697
        %v706 = vmul.f32 1.0, %v705
        %v707 = vrcp.pop %v698
        %v708 = vmul.f32 1.0, %v707
        %v709 = vrcp.pop %v699
        %v710 = vmul.f32 1.0, %v709
        %v711 = vrcp.pop %v700
        %v712 = vmul.f32 1.0, %v711
        %v713 = vrcp.pop %v701
        %v714 = vmul.f32 1.0, %v713
        %v715 = vrcp.pop %v702
        %v716 = vmul.f32 1.0, %v715
        %v717 = vrcp.pop %v703
        %v718 = vmul.f32 1.0, %v717
        %v719 = vrcp.pop %v704
        %v720 = vmul.f32 1.0, %v719
        %v721 = vmul.f32 %v464, %v706
        %v722 = vmul.f32 %v469, %v708
        %v723 = vmul.f32 %v474, %v710
        %v724 = vmul.f32 %v479, %v712
        %v725 = vmul.f32 %v484, %v714
        %v726 = vmul.f32 %v489, %v716
        %v727 = vmul.f32 %v494, %v718
        %v728 = vmul.f32 %v499, %v720
        %v729 = vadd.f32 %v721, %v352
        %v730 = vadd.f32 %v722, %v353
        %v731 = vadd.f32 %v723, %v354
        %v732 = vadd.f32 %v724, %v355
        %v733 = vadd.f32 %v725, %v356
        %v734 = vadd.f32 %v726, %v357
        %v735 = vadd.f32 %v727, %v358
        %v736 = vadd.f32 %v728, %v359
        %737 = vst [vmem:[%s325] sm:$0xff] %v729
        %738 = vst [vmem:[%s325 + $0x8] sm:$0xff] %v730
        %739 = vst [vmem:[%s325 + $0x10] sm:$0xff] %v731
        %740 = vst [vmem:[%s325 + $0x18] sm:$0xff] %v732
        %741 = vst [vmem:[%s325 + $0x20] sm:$0xff] %v733
        %742 = vst [vmem:[%s325 + $0x28] sm:$0xff] %v734
        %743 = vst [vmem:[%s325 + $0x30] sm:$0xff] %v735
        %744 = vst [vmem:[%s325 + $0x38] sm:$0xff] %v736
        %745 = vst [vmem:[%s351] sm:$0x7] %v508
        %s746 = sand.u32 %s137, 1
        %s747 = sand.u32 %s137, 1
        %s748 = smul.addr %s747, 64
        %s749 = scalar_lea.vmem [#allocation3], %s748
        %p750 = scmp.lt.s32.totalorder %s21, 1
        %s751 = scalar_select %p750, %s21, 1
        %p752 = scmp.lt.s32.totalorder %s22, 1
        %s753 = scalar_select %p752, %s22, 1
        %s754 = smul.addr %s751, 2
        %s755 = sadd.s32 %s753, %s754
        %s756 = smul.addr %s755, 4
        %s757 = scalar_lea.vmem %s5, %s756
        // Predicated region
        $region75: #{supervised_attention.1} parent=69 // pred_check
          %p758 = pneg %p147
        $region76: #{supervised_attention.1} parent=69 // pred_check_branch
          %760 = sbr.rel (%p758) target = $region78
        $region77: #{supervised_attention.1} parent=69 // pred_region
          %s761 = smul.addr %s21, 16
          %s762 = sadd.s32 %s22, %s761
          %s763 = smul.addr %s762, 8
          %s764 = scalar_lea.vmem %s4, %s763
          // Predicated region
          $region79: #{supervised_attention.1} parent=77 // pred_check
            _
          $region80: #{supervised_attention.1} parent=77 // pred_check_branch
            %766 = sbr.rel (0) target = $region82
          $region81: #{supervised_attention.1} parent=77 // pred_region
            // Predicated region
            $region83: #{supervised_attention.1} parent=81 // pred_check
              _
            $region84: #{supervised_attention.1} parent=81 // pred_check_branch
              %768 = sbr.rel (0) target = $region86
            $region85: #{supervised_attention.1} parent=81 // pred_region
              // Predicated region
              $region98: #{supervised_attention.1} parent=85 // pred_check
                _
              $region99: #{supervised_attention.1} parent=85 // pred_check_branch
                %798 = sbr.rel (0) target = $region101
              $region100: #{supervised_attention.1} parent=85 // pred_region
                loop: start=0, step=1, limit=1
                $region102: #{supervised_attention.1} parent=100 // loop_pre_header
                  _
                $region103: #{supervised_attention.1} parent=100 // loop_header
                  %s800 = sphi 0, %s804
                  %p801 = scmp.ge.s32.totalorder %s800, 1
                  %s805 = sphi %s749, %s749
                  %s806 = sphi %s764, %s764
                $region104: #{supervised_attention.1} parent=100 // loop_header_branch
                  %803 = sbr.rel (%p801) target = $region108
                $region105: #{supervised_attention.1} parent=100 // loop_body
                  %v807 = vld [vmem:[%s805] sm:$0xff]
                  %808 = vst [vmem:[%s806] sm:$0xff] %v807
                  %v809 = vld [vmem:[%s805 + $0x8] sm:$0xff]
                  %810 = vst [vmem:[%s806 + $0x10] sm:$0xff] %v809
                  %v811 = vld [vmem:[%s805 + $0x10] sm:$0xff]
                  %812 = vst [vmem:[%s806 + $0x20] sm:$0xff] %v811
                  %v813 = vld [vmem:[%s805 + $0x18] sm:$0xff]
                  %814 = vst [vmem:[%s806 + $0x30] sm:$0xff] %v813
                  %v815 = vld [vmem:[%s805 + $0x20] sm:$0xff]
                  %816 = vst [vmem:[%s806 + $0x40] sm:$0xff] %v815
                  %v817 = vld [vmem:[%s805 + $0x28] sm:$0xff]
                  %818 = vst [vmem:[%s806 + $0x50] sm:$0xff] %v817
                  %v819 = vld [vmem:[%s805 + $0x30] sm:$0xff]
                  %820 = vst [vmem:[%s806 + $0x60] sm:$0xff] %v819
                  %v821 = vld [vmem:[%s805 + $0x38] sm:$0xff]
                  %822 = vst [vmem:[%s806 + $0x70] sm:$0xff] %v821
                $region106: #{supervised_attention.1} parent=100 // loop_footer
                  %s804 = sadd.s32 1, %s800
                $region107: #{supervised_attention.1} parent=100 // loop_footer_branch
                  %799 = sbr.rel target = $region103
                $region108: #{supervised_attention.1} parent=100 // loop_exit
                  _
              $region101: #{supervised_attention.1} parent=85 // pred_fallthru
                _
              // Predicated region
              $region109: #{supervised_attention.1} parent=85 // pred_check
                _
              $region110: #{supervised_attention.1} parent=85 // pred_check_branch
                %824 = sbr.rel target = $region112
              $region111: #{supervised_attention.1} parent=85 // pred_region
                _
              $region112: #{supervised_attention.1} parent=85 // pred_fallthru
                _
            $region86: #{supervised_attention.1} parent=81 // pred_fallthru
              _
            // Predicated region
            $region87: #{supervised_attention.1} parent=81 // pred_check
              _
            $region88: #{supervised_attention.1} parent=81 // pred_check_branch
              %770 = sbr.rel target = $region90
            $region89: #{supervised_attention.1} parent=81 // pred_region
              %s772 = ssub.s32 256, 1
              loop: start=0, step=1, limit=1
              $region91: #{supervised_attention.1} parent=89 // loop_pre_header
                _
              $region92: #{supervised_attention.1} parent=89 // loop_header
                %s774 = sphi 0, %s778
                %p775 = scmp.ge.s32.totalorder %s774, 1
                %s779 = sphi %s749, %s749
                %s780 = sphi %s764, %s764
              $region93: #{supervised_attention.1} parent=89 // loop_header_branch
                %777 = sbr.rel (%p775) target = $region97
              $region94: #{supervised_attention.1} parent=89 // loop_body
                %v781 = vld [vmem:[%s779] sm:%s772]
                %782 = vst [vmem:[%s780] sm:%s772] %v781
                %v783 = vld [vmem:[%s779 + $0x8] sm:%s772]
                %784 = vst [vmem:[%s780 + $0x10] sm:%s772] %v783
                %v785 = vld [vmem:[%s779 + $0x10] sm:%s772]
                %786 = vst [vmem:[%s780 + $0x20] sm:%s772] %v785
                %v787 = vld [vmem:[%s779 + $0x18] sm:%s772]
                %788 = vst [vmem:[%s780 + $0x30] sm:%s772] %v787
                %v789 = vld [vmem:[%s779 + $0x20] sm:%s772]
                %790 = vst [vmem:[%s780 + $0x40] sm:%s772] %v789
                %v791 = vld [vmem:[%s779 + $0x28] sm:%s772]
                %792 = vst [vmem:[%s780 + $0x50] sm:%s772] %v791
                %v793 = vld [vmem:[%s779 + $0x30] sm:%s772]
                %794 = vst [vmem:[%s780 + $0x60] sm:%s772] %v793
                %v795 = vld [vmem:[%s779 + $0x38] sm:%s772]
                %796 = vst [vmem:[%s780 + $0x70] sm:%s772] %v795
              $region95: #{supervised_attention.1} parent=89 // loop_footer
                %s778 = sadd.s32 1, %s774
              $region96: #{supervised_attention.1} parent=89 // loop_footer_branch
                %773 = sbr.rel target = $region92
              $region97: #{supervised_attention.1} parent=89 // loop_exit
                _
            $region90: #{supervised_attention.1} parent=81 // pred_fallthru
              _
          $region82: #{supervised_attention.1} parent=77 // pred_fallthru
            _
          %825 = vnop
        $region78: #{supervised_attention.1} parent=69 // pred_fallthru
          _
        // Predicated region
        $region113: #{supervised_attention.1} parent=69 // pred_check
          %p826 = pneg %p175
        $region114: #{supervised_attention.1} parent=69 // pred_check_branch
          %828 = sbr.rel (%p826) target = $region116
        $region115: #{supervised_attention.1} parent=69 // pred_region
          _
        $region116: #{supervised_attention.1} parent=69 // pred_fallthru
          _
      $region70: #{supervised_attention.1} parent=5 // pred_fallthru
        _
      %p829 = scmp.le.s32.totalorder 2, %s12
      // Predicated region
      $region117: #{supervised_attention.1} parent=5 // pred_check
        %p830 = pneg %p829
      $region118: #{supervised_attention.1} parent=5 // pred_check_branch
        %832 = sbr.rel (%p830) target = $region120
      $region119: #{supervised_attention.1} parent=5 // pred_region
        %s833 = ssub.s32 %s12, 2
        // Predicated region
        $region121: #{supervised_attention.1} parent=119 // pred_check
          %p834 = pneg %p153
        $region122: #{supervised_attention.1} parent=119 // pred_check_branch
          %836 = sbr.rel (%p834) target = $region124
        $region123: #{supervised_attention.1} parent=119 // pred_region
          %s837 = sand.u32 %s138, 1
          %s838 = sand.u32 %s138, 1
          %s839 = smul.addr %s838, 64
          %s840 = scalar_lea.vmem [#allocation3], %s839
        $region124: #{supervised_attention.1} parent=119 // pred_fallthru
          _
        // Predicated region
        $region125: #{supervised_attention.1} parent=119 // pred_check
          %p841 = pneg %p181
        $region126: #{supervised_attention.1} parent=119 // pred_check_branch
          %843 = sbr.rel (%p841) target = $region128
        $region127: #{supervised_attention.1} parent=119 // pred_region
          %p844 = scmp.lt.s32.totalorder %s23, 1
          %s845 = scalar_select %p844, %s23, 1
          %p846 = scmp.lt.s32.totalorder %s24, 1
          %s847 = scalar_select %p846, %s24, 1
          %s848 = smul.addr %s845, 2
          %s849 = sadd.s32 %s847, %s848
          %s850 = smul.addr %s849, 4
          %s851 = scalar_lea.vmem %s5, %s850
        $region128: #{supervised_attention.1} parent=119 // pred_fallthru
          _
      $region120: #{supervised_attention.1} parent=5 // pred_fallthru
        _
    $region6: #{supervised_attention.1} parent=1 // loop_footer
      %s16 = sadd.s32 1, %s12
    $region7: #{supervised_attention.1} parent=1 // loop_footer_branch
      %11 = sbr.rel target = $region3
    $region8: #{supervised_attention.1} parent=1 // loop_exit
      _

</llo_original>
